<compile_context>
chip_gen: v7x
topology: tpu7x:2x2x1
jax: 0.10.0
libtpu: 0.0.40
codegen_flags: <defaults>
</compile_context>

<pallas_src>
import functools

import jax
import jax.numpy as jnp
from jax.experimental import pallas as pl
from jax.experimental.pallas import tpu as pltpu

HIDDEN = 256


def _round_up(x, m):
    return ((x + m - 1) // m) * m


def _critic_kernel(s_ref, a_ref,
                   w14s_ref, w14a_ref, b14_ref,
                   w2_ref, b2_ref, w5_ref, b5_ref,
                   w3_ref, b3_ref, w6_ref, b6_ref,
                   q_ref):
    """One batch tile: both Q branches, fused first layer, (TM, 2) output."""
    h_dim = w2_ref.shape[0]
    cdt = w2_ref.dtype  # compute dtype for MXU inputs (bf16)

    # Fused layer1|layer4: state @ Ws + action @ Wa + [b1|b4], ReLU.
    h = (jnp.dot(s_ref[...], w14s_ref[...], preferred_element_type=jnp.float32)
         + jnp.dot(a_ref[...], w14a_ref[...], preferred_element_type=jnp.float32)
         + b14_ref[...])
    h = jnp.maximum(h, 0.0).astype(cdt)
    h1 = h[:, :h_dim]        # Q1 branch hidden (lane-aligned static view)
    h2 = h[:, h_dim:]        # Q2 branch hidden

    # layer2 / layer5
    h1 = jnp.maximum(
        jnp.dot(h1, w2_ref[...], preferred_element_type=jnp.float32) + b2_ref[...],
        0.0).astype(cdt)
    h2 = jnp.maximum(
        jnp.dot(h2, w5_ref[...], preferred_element_type=jnp.float32) + b5_ref[...],
        0.0).astype(cdt)

    # layer3 / layer6, fused into one lane-dense (TM, 2) store.
    q1 = jnp.dot(h1, w3_ref[...], preferred_element_type=jnp.float32) + b3_ref[...]
    q2 = jnp.dot(h2, w6_ref[...], preferred_element_type=jnp.float32) + b6_ref[...]
    q_ref[...] = jnp.concatenate([q1, q2], axis=1).astype(q_ref.dtype)


def pack_critic_params(params, state_dim, compute_dtype=jnp.bfloat16):
    """Pre-pack PyTorch-layout params for the kernel (done once, outside jit)."""
    w14 = jnp.concatenate([params["w1"], params["w4"]], axis=1)  # (in, 2H)
    return {
        "w14_s": w14[:state_dim].astype(compute_dtype),          # (state_dim, 2H)
        "w14_a": w14[state_dim:].astype(compute_dtype),          # (action_dim, 2H)
        "b14": jnp.concatenate([params["b1"], params["b4"]], axis=1).astype(jnp.float32),
        "w2": params["w2"].astype(compute_dtype), "b2": params["b2"].astype(jnp.float32),
        "w5": params["w5"].astype(compute_dtype), "b5": params["b5"].astype(jnp.float32),
        "w3": params["w3"].astype(compute_dtype), "b3": params["b3"].astype(jnp.float32),
        "w6": params["w6"].astype(compute_dtype), "b6": params["b6"].astype(jnp.float32),
    }


@functools.partial(jax.jit, static_argnames=("tm",))
def critic_forward(state, action, p, *, tm=None):
    """Pallas Critic.forward(state, action) -> (q1, q2), each (B, 1) float32."""
    B, state_dim = state.shape
    action_dim = action.shape[1]
    H = p["w2"].shape[0]
    cdt = p["w2"].dtype

    # Batch tile: 256 keeps the v6e MXU M-dim full; tiny batches use one tile.
    if tm is None:
        tm = 256 if B >= 256 else _round_up(B, 8)
    Bp = _round_up(B, tm)
    if Bp != B:
        state = jnp.pad(state, ((0, Bp - B), (0, 0)))
        action = jnp.pad(action, ((0, Bp - B), (0, 0)))
    state = state.astype(cdt)
    action = action.astype(cdt)

    grid = (Bp // tm,)
    resident = lambda i: (0, 0)          # weights stay in VMEM across the grid
    in_specs = [
        pl.BlockSpec((tm, state_dim), lambda i: (i, 0)),
        pl.BlockSpec((tm, action_dim), lambda i: (i, 0)),
        pl.BlockSpec((state_dim, 2 * H), resident),
        pl.BlockSpec((action_dim, 2 * H), resident),
        pl.BlockSpec((1, 2 * H), resident),
        pl.BlockSpec((H, H), resident),
        pl.BlockSpec((1, H), resident),
        pl.BlockSpec((H, H), resident),
        pl.BlockSpec((1, H), resident),
        pl.BlockSpec((H, 1), resident),
        pl.BlockSpec((1, 1), resident),
        pl.BlockSpec((H, 1), resident),
        pl.BlockSpec((1, 1), resident),
    ]
    out_specs = pl.BlockSpec((tm, 2), lambda i: (i, 0))

    in_dim = state_dim + action_dim
    flops = 2 * Bp * (in_dim * 2 * H + 2 * H * H + 2 * H)
    weight_bytes = sum(int(v.size) * v.dtype.itemsize for v in p.values())
    act_bytes = Bp * (in_dim * 2 + 2 * 4)   # bf16 inputs + f32 (B, 2) output
    cost = pl.CostEstimate(flops=flops, transcendentals=0,
                           bytes_accessed=weight_bytes + act_bytes)

    q = pl.pallas_call(
        _critic_kernel,
        out_shape=jax.ShapeDtypeStruct((Bp, 2), jnp.float32),
        grid=grid,
        in_specs=in_specs,
        out_specs=out_specs,
        compiler_params=pltpu.CompilerParams(
            dimension_semantics=("parallel",)),
        cost_estimate=cost,
    )(state, action,
      p["w14_s"], p["w14_a"], p["b14"],
      p["w2"], p["b2"], p["w5"], p["b5"],
      p["w3"], p["b3"], p["w6"], p["b6"])

    q = q[:B]
    return q[:, 0:1], q[:, 1:2]


def init_critic_params(key, state_dim, action_dim, hidden=HIDDEN):
    """Synthetic init mirroring nn.Linear shapes (W stored transposed: (in, out))."""
    in_dim = state_dim + action_dim
    dims = [
        (in_dim, hidden), (hidden, hidden), (hidden, 1),   # Q1: layer1..3
        (in_dim, hidden), (hidden, hidden), (hidden, 1),   # Q2: layer4..6
    ]
    params = {}
    for i, (fin, fout) in enumerate(dims, start=1):
        key, kw, kb = jax.random.split(key, 3)
        bound = 1.0 / jnp.sqrt(fin)
        params[f"w{i}"] = jax.random.uniform(kw, (fin, fout), jnp.float32, -bound, bound)
        params[f"b{i}"] = jax.random.uniform(kb, (1, fout), jnp.float32, -bound, bound)
    return params


def _reference_forward(state, action, p):
    """Pure-JAX reference using the same packed (bf16) params as the kernel."""
    cdt = p["w2"].dtype
    H = p["w2"].shape[0]
    s = state.astype(cdt)
    a = action.astype(cdt)
    h = (jnp.dot(s, p["w14_s"], preferred_element_type=jnp.float32)
         + jnp.dot(a, p["w14_a"], preferred_element_type=jnp.float32) + p["b14"])
    h = jnp.maximum(h, 0.0).astype(cdt)
    h1, h2 = h[:, :H], h[:, H:]
    h1 = jnp.maximum(
        jnp.dot(h1, p["w2"], preferred_element_type=jnp.float32) + p["b2"], 0.0).astype(cdt)
    h2 = jnp.maximum(
        jnp.dot(h2, p["w5"], preferred_element_type=jnp.float32) + p["b5"], 0.0).astype(cdt)
    q1 = jnp.dot(h1, p["w3"], preferred_element_type=jnp.float32) + p["b3"]
    q2 = jnp.dot(h2, p["w6"], preferred_element_type=jnp.float32) + p["b6"]
    return q1, q2


if __name__ == "__main__":
    state_dim, action_dim, batch = 12, 4, 8

    key = jax.random.PRNGKey(0)
    kp, ks, ka = jax.random.split(key, 3)
    raw_params = init_critic_params(kp, state_dim, action_dim)
    packed = pack_critic_params(raw_params, state_dim)

    state = jax.random.normal(ks, (batch, state_dim), jnp.float32)
    action = jax.random.normal(ka, (batch, action_dim), jnp.float32)

    q1, q2 = critic_forward(state, action, packed)
    jax.block_until_ready((q1, q2))

    q1_ref, q2_ref = _reference_forward(state, action, packed)
    assert q1.shape == (batch, 1) and q2.shape == (batch, 1)
    assert jnp.allclose(q1, q1_ref, atol=1e-2, rtol=1e-2)
    assert jnp.allclose(q2, q2_ref, atol=1e-2, rtol=1e-2)

    print("KERNEL_OK")
</pallas_src>

<mosaic_0001>
module attributes {stable_mosaic.version = 11 : i64} {
  func.func @_critic_kernel(%arg0: i32, %arg1: memref<8x12xbf16, #tpu.memory_space<vmem>>, %arg2: memref<8x4xbf16, #tpu.memory_space<vmem>>, %arg3: memref<12x512xbf16, #tpu.memory_space<vmem>>, %arg4: memref<4x512xbf16, #tpu.memory_space<vmem>>, %arg5: memref<1x512xf32, #tpu.memory_space<vmem>>, %arg6: memref<256x256xbf16, #tpu.memory_space<vmem>>, %arg7: memref<1x256xf32, #tpu.memory_space<vmem>>, %arg8: memref<256x256xbf16, #tpu.memory_space<vmem>>, %arg9: memref<1x256xf32, #tpu.memory_space<vmem>>, %arg10: memref<256x1xbf16, #tpu.memory_space<vmem>>, %arg11: memref<1x1xf32, #tpu.memory_space<vmem>>, %arg12: memref<256x1xbf16, #tpu.memory_space<vmem>>, %arg13: memref<1x1xf32, #tpu.memory_space<vmem>>, %arg14: memref<8x2xf32, #tpu.memory_space<vmem>>) attributes {dimension_semantics = [#tpu.dimension_semantics<parallel>], iteration_bounds = array<i64: 1>, scalar_prefetch = 0 : i64, scratch_operands = 0 : i64, tpu.core_type = #tpu.core_type<tc>, window_params = [{transform_indices = @transform_0, window_bounds = array<i64: 8, 12>}, {transform_indices = @transform_1, window_bounds = array<i64: 8, 4>}, {pipeline_mode = #tpu.pipeline_mode<synchronous>, transform_indices = @transform_2, window_bounds = array<i64: 12, 512>}, {pipeline_mode = #tpu.pipeline_mode<synchronous>, transform_indices = @transform_3, window_bounds = array<i64: 4, 512>}, {pipeline_mode = #tpu.pipeline_mode<synchronous>, transform_indices = @transform_4, window_bounds = array<i64: 1, 512>}, {pipeline_mode = #tpu.pipeline_mode<synchronous>, transform_indices = @transform_5, window_bounds = array<i64: 256, 256>}, {pipeline_mode = #tpu.pipeline_mode<synchronous>, transform_indices = @transform_6, window_bounds = array<i64: 1, 256>}, {pipeline_mode = #tpu.pipeline_mode<synchronous>, transform_indices = @transform_7, window_bounds = array<i64: 256, 256>}, {pipeline_mode = #tpu.pipeline_mode<synchronous>, transform_indices = @transform_8, window_bounds = array<i64: 1, 256>}, {pipeline_mode = #tpu.pipeline_mode<synchronous>, transform_indices = @transform_9, window_bounds = array<i64: 256, 1>}, {pipeline_mode = #tpu.pipeline_mode<synchronous>, transform_indices = @transform_10, window_bounds = array<i64: 1, 1>}, {pipeline_mode = #tpu.pipeline_mode<synchronous>, transform_indices = @transform_11, window_bounds = array<i64: 256, 1>}, {pipeline_mode = #tpu.pipeline_mode<synchronous>, transform_indices = @transform_12, window_bounds = array<i64: 1, 1>}, {transform_indices = @transform_13, window_bounds = array<i64: 8, 2>}]} {
    %c0 = arith.constant 0 : index
    %c0_0 = arith.constant 0 : index
    %0 = vector.load %arg1[%c0, %c0_0] : memref<8x12xbf16, #tpu.memory_space<vmem>>, vector<8x12xbf16>
    %c0_1 = arith.constant 0 : index
    %c0_2 = arith.constant 0 : index
    %1 = vector.load %arg3[%c0_1, %c0_2] : memref<12x512xbf16, #tpu.memory_space<vmem>>, vector<12x512xbf16>
    %cst = arith.constant dense<0.000000e+00> : vector<8x512xf32>
    %2 = tpu.matmul %0, %1, %cst {dimension_numbers = #tpu.dot_dimension_numbers<[1], [0], [0], [1], [0, 0, 1, 1], [], []>} : vector<8x12xbf16>, vector<12x512xbf16>, vector<8x512xf32> -> vector<8x512xf32>
    %c0_3 = arith.constant 0 : index
    %c0_4 = arith.constant 0 : index
    %3 = vector.load %arg2[%c0_3, %c0_4] : memref<8x4xbf16, #tpu.memory_space<vmem>>, vector<8x4xbf16>
    %c0_5 = arith.constant 0 : index
    %c0_6 = arith.constant 0 : index
    %4 = vector.load %arg4[%c0_5, %c0_6] : memref<4x512xbf16, #tpu.memory_space<vmem>>, vector<4x512xbf16>
    %cst_7 = arith.constant dense<0.000000e+00> : vector<8x512xf32>
    %5 = tpu.matmul %3, %4, %cst_7 {dimension_numbers = #tpu.dot_dimension_numbers<[1], [0], [0], [1], [0, 0, 1, 1], [], []>} : vector<8x4xbf16>, vector<4x512xbf16>, vector<8x512xf32> -> vector<8x512xf32>
    %6 = arith.addf %2, %5 : vector<8x512xf32>
    %c0_8 = arith.constant 0 : index
    %c0_9 = arith.constant 0 : index
    %7 = vector.load %arg5[%c0_8, %c0_9] : memref<1x512xf32, #tpu.memory_space<vmem>>, vector<1x512xf32>
    %8 = vector.broadcast %7 : vector<1x512xf32> to vector<8x512xf32>
    %9 = arith.addf %6, %8 : vector<8x512xf32>
    %cst_10 = arith.constant 0.000000e+00 : f32
    %10 = vector.broadcast %cst_10 : f32 to vector<8x512xf32>
    %11 = arith.maximumf %9, %10 : vector<8x512xf32>
    %12 = arith.truncf %11 : vector<8x512xf32> to vector<8x512xbf16>
    %13 = vector.extract_strided_slice %12 {offsets = [0, 0], sizes = [8, 256], strides = [1, 1]} : vector<8x512xbf16> to vector<8x256xbf16>
    %14 = vector.extract_strided_slice %12 {offsets = [0, 256], sizes = [8, 256], strides = [1, 1]} : vector<8x512xbf16> to vector<8x256xbf16>
    %c0_11 = arith.constant 0 : index
    %c0_12 = arith.constant 0 : index
    %15 = vector.load %arg6[%c0_11, %c0_12] : memref<256x256xbf16, #tpu.memory_space<vmem>>, vector<256x256xbf16>
    %cst_13 = arith.constant dense<0.000000e+00> : vector<8x256xf32>
    %16 = tpu.matmul %13, %15, %cst_13 {dimension_numbers = #tpu.dot_dimension_numbers<[1], [0], [0], [1], [0, 0, 1, 1], [], []>} : vector<8x256xbf16>, vector<256x256xbf16>, vector<8x256xf32> -> vector<8x256xf32>
    %c0_14 = arith.constant 0 : index
    %c0_15 = arith.constant 0 : index
    %17 = vector.load %arg7[%c0_14, %c0_15] : memref<1x256xf32, #tpu.memory_space<vmem>>, vector<1x256xf32>
    %18 = vector.broadcast %17 : vector<1x256xf32> to vector<8x256xf32>
    %19 = arith.addf %16, %18 : vector<8x256xf32>
    %cst_16 = arith.constant 0.000000e+00 : f32
    %20 = vector.broadcast %cst_16 : f32 to vector<8x256xf32>
    %21 = arith.maximumf %19, %20 : vector<8x256xf32>
    %22 = arith.truncf %21 : vector<8x256xf32> to vector<8x256xbf16>
    %c0_17 = arith.constant 0 : index
    %c0_18 = arith.constant 0 : index
    %23 = vector.load %arg8[%c0_17, %c0_18] : memref<256x256xbf16, #tpu.memory_space<vmem>>, vector<256x256xbf16>
    %cst_19 = arith.constant dense<0.000000e+00> : vector<8x256xf32>
    %24 = tpu.matmul %14, %23, %cst_19 {dimension_numbers = #tpu.dot_dimension_numbers<[1], [0], [0], [1], [0, 0, 1, 1], [], []>} : vector<8x256xbf16>, vector<256x256xbf16>, vector<8x256xf32> -> vector<8x256xf32>
    %c0_20 = arith.constant 0 : index
    %c0_21 = arith.constant 0 : index
    %25 = vector.load %arg9[%c0_20, %c0_21] : memref<1x256xf32, #tpu.memory_space<vmem>>, vector<1x256xf32>
    %26 = vector.broadcast %25 : vector<1x256xf32> to vector<8x256xf32>
    %27 = arith.addf %24, %26 : vector<8x256xf32>
    %cst_22 = arith.constant 0.000000e+00 : f32
    %28 = vector.broadcast %cst_22 : f32 to vector<8x256xf32>
    %29 = arith.maximumf %27, %28 : vector<8x256xf32>
    %30 = arith.truncf %29 : vector<8x256xf32> to vector<8x256xbf16>
    %c0_23 = arith.constant 0 : index
    %c0_24 = arith.constant 0 : index
    %31 = vector.load %arg10[%c0_23, %c0_24] : memref<256x1xbf16, #tpu.memory_space<vmem>>, vector<256x1xbf16>
    %cst_25 = arith.constant dense<0.000000e+00> : vector<8x1xf32>
    %32 = tpu.matmul %22, %31, %cst_25 {dimension_numbers = #tpu.dot_dimension_numbers<[1], [0], [0], [1], [0, 0, 1, 1], [], []>} : vector<8x256xbf16>, vector<256x1xbf16>, vector<8x1xf32> -> vector<8x1xf32>
    %c0_26 = arith.constant 0 : index
    %c0_27 = arith.constant 0 : index
    %33 = vector.load %arg11[%c0_26, %c0_27] : memref<1x1xf32, #tpu.memory_space<vmem>>, vector<1x1xf32>
    %34 = vector.broadcast %33 : vector<1x1xf32> to vector<8x1xf32>
    %35 = arith.addf %32, %34 : vector<8x1xf32>
    %c0_28 = arith.constant 0 : index
    %c0_29 = arith.constant 0 : index
    %36 = vector.load %arg12[%c0_28, %c0_29] : memref<256x1xbf16, #tpu.memory_space<vmem>>, vector<256x1xbf16>
    %cst_30 = arith.constant dense<0.000000e+00> : vector<8x1xf32>
    %37 = tpu.matmul %30, %36, %cst_30 {dimension_numbers = #tpu.dot_dimension_numbers<[1], [0], [0], [1], [0, 0, 1, 1], [], []>} : vector<8x256xbf16>, vector<256x1xbf16>, vector<8x1xf32> -> vector<8x1xf32>
    %c0_31 = arith.constant 0 : index
    %c0_32 = arith.constant 0 : index
    %38 = vector.load %arg13[%c0_31, %c0_32] : memref<1x1xf32, #tpu.memory_space<vmem>>, vector<1x1xf32>
    %39 = vector.broadcast %38 : vector<1x1xf32> to vector<8x1xf32>
    %40 = arith.addf %37, %39 : vector<8x1xf32>
    %41 = tpu.concatenate %35, %40 in 1 : vector<8x1xf32>, vector<8x1xf32> -> vector<8x2xf32>
    %c0_33 = arith.constant 0 : index
    %c0_34 = arith.constant 0 : index
    %42 = vector.load %arg14[%c0_33, %c0_34] : memref<8x2xf32, #tpu.memory_space<vmem>>, vector<8x2xf32>
    tpu.vector_store %arg14[%c0_33, %c0_34], %41 {strides = array<i32>} : memref<8x2xf32, #tpu.memory_space<vmem>>, vector<8x2xf32>,
    return
  }
  func.func @transform_0(%arg0: i32) -> (i32, i32) {
    %c0_i32 = arith.constant 0 : i32
    %c0_i32_0 = arith.constant 0 : i32
    return %arg0, %c0_i32 : i32, i32
  }
  func.func @transform_1(%arg0: i32) -> (i32, i32) {
    %c0_i32 = arith.constant 0 : i32
    %c0_i32_0 = arith.constant 0 : i32
    return %arg0, %c0_i32 : i32, i32
  }
  func.func @transform_2(%arg0: i32) -> (i32, i32) {
    %c0_i32 = arith.constant 0 : i32
    %c0_i32_0 = arith.constant 0 : i32
    %c0_i32_1 = arith.constant 0 : i32
    return %c0_i32, %c0_i32_0 : i32, i32
  }
  func.func @transform_3(%arg0: i32) -> (i32, i32) {
    %c0_i32 = arith.constant 0 : i32
    %c0_i32_0 = arith.constant 0 : i32
    %c0_i32_1 = arith.constant 0 : i32
    return %c0_i32, %c0_i32_0 : i32, i32
  }
  func.func @transform_4(%arg0: i32) -> (i32, i32) {
    %c0_i32 = arith.constant 0 : i32
    %c0_i32_0 = arith.constant 0 : i32
    %c0_i32_1 = arith.constant 0 : i32
    return %c0_i32, %c0_i32_0 : i32, i32
  }
  func.func @transform_5(%arg0: i32) -> (i32, i32) {
    %c0_i32 = arith.constant 0 : i32
    %c0_i32_0 = arith.constant 0 : i32
    %c0_i32_1 = arith.constant 0 : i32
    return %c0_i32, %c0_i32_0 : i32, i32
  }
  func.func @transform_6(%arg0: i32) -> (i32, i32) {
    %c0_i32 = arith.constant 0 : i32
    %c0_i32_0 = arith.constant 0 : i32
    %c0_i32_1 = arith.constant 0 : i32
    return %c0_i32, %c0_i32_0 : i32, i32
  }
  func.func @transform_7(%arg0: i32) -> (i32, i32) {
    %c0_i32 = arith.constant 0 : i32
    %c0_i32_0 = arith.constant 0 : i32
    %c0_i32_1 = arith.constant 0 : i32
    return %c0_i32, %c0_i32_0 : i32, i32
  }
  func.func @transform_8(%arg0: i32) -> (i32, i32) {
    %c0_i32 = arith.constant 0 : i32
    %c0_i32_0 = arith.constant 0 : i32
    %c0_i32_1 = arith.constant 0 : i32
    return %c0_i32, %c0_i32_0 : i32, i32
  }
  func.func @transform_9(%arg0: i32) -> (i32, i32) {
    %c0_i32 = arith.constant 0 : i32
    %c0_i32_0 = arith.constant 0 : i32
    %c0_i32_1 = arith.constant 0 : i32
    return %c0_i32, %c0_i32_0 : i32, i32
  }
  func.func @transform_10(%arg0: i32) -> (i32, i32) {
    %c0_i32 = arith.constant 0 : i32
    %c0_i32_0 = arith.constant 0 : i32
    %c0_i32_1 = arith.constant 0 : i32
    return %c0_i32, %c0_i32_0 : i32, i32
  }
  func.func @transform_11(%arg0: i32) -> (i32, i32) {
    %c0_i32 = arith.constant 0 : i32
    %c0_i32_0 = arith.constant 0 : i32
    %c0_i32_1 = arith.constant 0 : i32
    return %c0_i32, %c0_i32_0 : i32, i32
  }
  func.func @transform_12(%arg0: i32) -> (i32, i32) {
    %c0_i32 = arith.constant 0 : i32
    %c0_i32_0 = arith.constant 0 : i32
    %c0_i32_1 = arith.constant 0 : i32
    return %c0_i32, %c0_i32_0 : i32, i32
  }
  func.func @transform_13(%arg0: i32) -> (i32, i32) {
    %c0_i32 = arith.constant 0 : i32
    %c0_i32_0 = arith.constant 0 : i32
    return %arg0, %c0_i32 : i32, i32
  }
}

</mosaic_0001>

<llo_original>
// kernel: critic_forward.1
$region0: #{critic_forward.1}
  #allocation0 [shape = 'u32[]', space=smem, size = 0x4, offset = 0x4, fixed_abs, tag = 'smem constant byte address 0x4 - core index']
  #allocation1 [shape = 'u32[144,128]{1,0:T(1,128)}', space=vmem, size = 0x12000, scoped, tag = 'internal scratch']
  #allocation2 [shape = 'f32[1,1]{1,0:T(1,128)S(1)}', space=vmem, size = 0x200, scoped, tag = 'scoped memory for critic_forward.1']
  #allocation3 [shape = 'f32[1,1]{1,0:T(1,128)S(1)}', space=vmem, size = 0x200, scoped, tag = 'scoped memory for critic_forward.1']
  %s0 = inlined_call_operand.vmem [shape: bf16[8,12], index: 0, kind: input, shape index: {}]
  %s1 = inlined_call_operand.vmem [shape: bf16[8,4], index: 1, kind: input, shape index: {}]
  %s2 = inlined_call_operand.vmem [shape: bf16[12,512], index: 2, kind: input, shape index: {}]
  %s3 = inlined_call_operand.vmem [shape: bf16[4,512], index: 3, kind: input, shape index: {}]
  %s4 = inlined_call_operand.vmem [shape: f32[1,512], index: 4, kind: input, shape index: {}]
  %s5 = inlined_call_operand.vmem [shape: bf16[256,256], index: 5, kind: input, shape index: {}]
  %s6 = inlined_call_operand.vmem [shape: f32[1,256], index: 6, kind: input, shape index: {}]
  %s7 = inlined_call_operand.hbm [shape: bf16[256,256], index: 7, kind: input, shape index: {}]
  %s8 = inlined_call_operand.vmem [shape: f32[1,256], index: 8, kind: input, shape index: {}]
  %s9 = inlined_call_operand.vmem [shape: bf16[256,1], index: 9, kind: input, shape index: {}]
  %s10 = inlined_call_operand.<no memory space> [shape: f32[1,1], index: 10, kind: input, shape index: {}]
  %s11 = inlined_call_operand.vmem [shape: bf16[256,1], index: 11, kind: input, shape index: {}]
  %s12 = inlined_call_operand.<no memory space> [shape: f32[1,1], index: 12, kind: input, shape index: {}]
  %s13 = inlined_call_operand.vmem [shape: f32[8,2], index: 13, kind: output, shape index: {}]
  %s14 = sld [smem:[#allocation0]]
  $region66: #{critic_forward.1} parent=0
    _
  %s16 = ssub.s32 1, %s14
  %s17 = scalar_select 0, %s16, %s14
  %v18 = vstv %s10
  %19 = vst [vmem:[#allocation2] sm:$0x1] %v18
  %v20 = vstv %s12
  %21 = vst [vmem:[#allocation3] sm:$0x1] %v20
  $region1: #{critic_forward.1} parent=0
    #allocation4 [shape = 'u8[131072]{0}', space=vmem, size = 0x20000, scoped, tag = 'input window, operand 7, single buffered']
    #allocation5 [shape = 's32[1]{0}', space=sflag, size = 0x4, scoped, tag = 'scoped memory for critic_forward.1']
    %22 = vsyncpa [#allocation5], 0
    // Predicated region
    $region2: #{critic_forward.1} parent=1 // pred_check
      _
    $region3: #{critic_forward.1} parent=1 // pred_check_branch
      %24 = sbr.rel (0) target = $region5
    $region4: #{critic_forward.1} parent=1 // pred_region
      _
    $region5: #{critic_forward.1} parent=1 // pred_fallthru
      _
    // Predicated region
    $region6: #{critic_forward.1} parent=1 // pred_check
      _
    $region7: #{critic_forward.1} parent=1 // pred_check_branch
      %26 = sbr.rel (0) target = $region9
    $region8: #{critic_forward.1} parent=1 // pred_region
      _
    $region9: #{critic_forward.1} parent=1 // pred_fallthru
      _
    // Predicated region
    $region10: #{critic_forward.1} parent=1 // pred_check
      _
    $region11: #{critic_forward.1} parent=1 // pred_check_branch
      %28 = sbr.rel (0) target = $region13
    $region12: #{critic_forward.1} parent=1 // pred_region
      _
    $region13: #{critic_forward.1} parent=1 // pred_fallthru
      _
    // Predicated region
    $region14: #{critic_forward.1} parent=1 // pred_check
      _
    $region15: #{critic_forward.1} parent=1 // pred_check_branch
      %30 = sbr.rel (0) target = $region17
    $region16: #{critic_forward.1} parent=1 // pred_region
      _
    $region17: #{critic_forward.1} parent=1 // pred_fallthru
      _
    // Predicated region
    $region18: #{critic_forward.1} parent=1 // pred_check
      _
    $region19: #{critic_forward.1} parent=1 // pred_check_branch
      %32 = sbr.rel (0) target = $region21
    $region20: #{critic_forward.1} parent=1 // pred_region
      _
    $region21: #{critic_forward.1} parent=1 // pred_fallthru
      _
    // Predicated region
    $region22: #{critic_forward.1} parent=1 // pred_check
      _
    $region23: #{critic_forward.1} parent=1 // pred_check_branch
      %34 = sbr.rel (0) target = $region25
    $region24: #{critic_forward.1} parent=1 // pred_region
      _
    $region25: #{critic_forward.1} parent=1 // pred_fallthru
      _
    // Predicated region
    $region26: #{critic_forward.1} parent=1 // pred_check
      _
    $region27: #{critic_forward.1} parent=1 // pred_check_branch
      %36 = sbr.rel (0) target = $region29
    $region28: #{critic_forward.1} parent=1 // pred_region
      _
    $region29: #{critic_forward.1} parent=1 // pred_fallthru
      _
    // Predicated region
    $region30: #{critic_forward.1} parent=1 // pred_check
      _
    $region31: #{critic_forward.1} parent=1 // pred_check_branch
      %38 = sbr.rel (0) target = $region33
    $region32: #{critic_forward.1} parent=1 // pred_region
      %s40 = ssub.s32 4096, 4096
      %41 = vsyncadd [#allocation5], %s40
      %s42 = sshll.u32 [#allocation4], 4
      %s43 = int_to_ptr.vmem [resolvable:$true] %s42
      %48 = dma.hbm_to_vmem [thread:$0]  %s7, 4096, %s43, [#allocation5], 128, 128, 8
    $region33: #{critic_forward.1} parent=1 // pred_fallthru
      _
    // Predicated region
    $region34: #{critic_forward.1} parent=1 // pred_check
      _
    $region35: #{critic_forward.1} parent=1 // pred_check_branch
      %50 = sbr.rel (0) target = $region37
    $region36: #{critic_forward.1} parent=1 // pred_region
      _
    $region37: #{critic_forward.1} parent=1 // pred_fallthru
      _
    // Predicated region
    $region38: #{critic_forward.1} parent=1 // pred_check
      _
    $region39: #{critic_forward.1} parent=1 // pred_check_branch
      %52 = sbr.rel (0) target = $region41
    $region40: #{critic_forward.1} parent=1 // pred_region
      _
    $region41: #{critic_forward.1} parent=1 // pred_fallthru
      _
    // Predicated region
    $region42: #{critic_forward.1} parent=1 // pred_check
      _
    $region43: #{critic_forward.1} parent=1 // pred_check_branch
      %54 = sbr.rel (0) target = $region45
    $region44: #{critic_forward.1} parent=1 // pred_region
      _
    $region45: #{critic_forward.1} parent=1 // pred_fallthru
      _
    // Predicated region
    $region46: #{critic_forward.1} parent=1 // pred_check
      _
    $region47: #{critic_forward.1} parent=1 // pred_check_branch
      %56 = sbr.rel (0) target = $region49
    $region48: #{critic_forward.1} parent=1 // pred_region
      _
    $region49: #{critic_forward.1} parent=1 // pred_fallthru
      _
    // Predicated region
    $region50: #{critic_forward.1} parent=1 // pred_check
      _
    $region51: #{critic_forward.1} parent=1 // pred_check_branch
      %58 = sbr.rel (0) target = $region53
    $region52: #{critic_forward.1} parent=1 // pred_region
      _
    $region53: #{critic_forward.1} parent=1 // pred_fallthru
      _
    // Predicated region
    $region54: #{critic_forward.1} parent=1 // pred_check
      _
    $region55: #{critic_forward.1} parent=1 // pred_check_branch
      %60 = sbr.rel (0) target = $region57
    $region56: #{critic_forward.1} parent=1 // pred_region
      %61 = dma.done [#allocation5], 4096
    $region57: #{critic_forward.1} parent=1 // pred_fallthru
      _
    %v63 = vld [vmem:[%s0] sm:$0xf]
    %v64 = vld [vmem:[%s2] sm:$0xff]
    %v65 = vld [vmem:[%s2 + $0x8] sm:$0xff]
    %v66 = vld [vmem:[%s2 + $0x10] sm:$0x33]
    %v67 = vld [vmem:[%s2 + $0x18] sm:$0x33]
    %v68 = vld [vmem:[%s1] sm:$0xf]
    %v69 = vld [vmem:[%s3] sm:$0xff]
    %v71 = vcombine.high %v69, %v69
    %v73 = vunpack.c.l.s4 1983009808
    %v74 = vunpack.c.0.s8 %v73
    %v75 = vlaneseq
    %v76 = vshrl.u32 %v75, 7
    %v77 = vsub.s32 %v74, %v76
    %v78 = vrot.slane %v69, %v77
    %v80 = vunpack.c.l.s4 1983009808
    %v81 = vunpack.c.0.s8 %v80
    %v82 = vlaneseq
    %v83 = vshrl.u32 %v82, 7
    %v84 = vsub.s32 %v81, %v83
    %v85 = vrot.slane %v71, %v84
    %v86 = vcombine.high %v78, %v78
    %v87 = vcombine.high %v85, %v85
    %vm88 = vcmask 31744
    %v90 = vsel %vm88, %v68, 0
    %vm92 = vcmask 1041408
    %v94 = vsel %vm92, %v78, 0
    %v97 = vsel %vm92, %v86, 0
    %v100 = vsel %vm92, %v85, 0
    %v103 = vsel %vm92, %v87, 0
    %105 = vmatprep.subr.bf16.mxu0 %v97
    %106 = vmatpush1.bf16.msra.mxu0 %v94
    %107 = vmatprep.subr.bf16.mxu0 0
    %108 = vmatpush1.bf16.msra.mxu0 0
    %109 = vmatprep.subr.bf16.mxu0 0
    %110 = vmatpush1.bf16.msra.mxu0 0
    %111 = vmatprep.subr.bf16.mxu0 0
    %112 = vmatpush1.bf16.msra.mxu0 0
    %113 = vmatprep.subr.bf16.mxu0 0
    %114 = vmatpush1.bf16.msra.mxu0 0
    %115 = vmatprep.subr.bf16.mxu0 0
    %116 = vmatpush1.bf16.msra.mxu0 0
    %117 = vmatprep.subr.bf16.mxu0 0
    %118 = vmatpush1.bf16.msra.mxu0 0
    %119 = vmatprep.subr.bf16.mxu0 0
    %120 = vmatpush1.bf16.msra.mxu0 0
    %121 = vmatprep.subr.bf16.mxu0 0
    %122 = vmatpush1.bf16.msra.mxu0 0
    %123 = vmatprep.subr.bf16.mxu0 0
    %124 = vmatpush1.bf16.msra.mxu0 0
    %125 = vmatprep.subr.bf16.mxu0 0
    %126 = vmatpush1.bf16.msra.mxu0 0
    %127 = vmatprep.subr.bf16.mxu0 0
    %128 = vmatpush1.bf16.msra.mxu0 0
    %129 = vmatprep.subr.bf16.mxu0 0
    %130 = vmatpush1.bf16.msra.mxu0 0
    %131 = vmatprep.subr.bf16.mxu0 0
    %132 = vmatpush1.bf16.msra.mxu0 0
    %133 = vmatprep.subr.bf16.mxu0 0
    %134 = vmatpush1.bf16.msra.mxu0 0
    %135 = vmatprep.subr.bf16.mxu0 0
    %136 = vmatpush1.bf16.msra.mxu0 0
    %137 = vmatprep.mubr.bf16.mxu0 0
    %138 = vmatmul.mubr.bf16.gmra.mrb[0].mxu0 %v90
    %v139 = vpop.f32.mrb[0].mxu0
    %v140 = vadd.f32 0.0, %v139
    %v141 = vpop.f32.mrb[0].mxu0
    %v142 = vadd.f32 0.0, %v141
    %v143 = vpop.f32.mrb[0].mxu0
    %v144 = vpop.f32.mrb[0].mxu0
    %145 = vdwg.mxu0
    %146 = vmatprep.subr.bf16.mxu0 %v103
    %147 = vmatpush1.bf16.msra.mxu0 %v100
    %148 = vmatprep.subr.bf16.mxu0 0
    %149 = vmatpush1.bf16.msra.mxu0 0
    %150 = vmatprep.subr.bf16.mxu0 0
    %151 = vmatpush1.bf16.msra.mxu0 0
    %152 = vmatprep.subr.bf16.mxu0 0
    %153 = vmatpush1.bf16.msra.mxu0 0
    %154 = vmatprep.subr.bf16.mxu0 0
    %155 = vmatpush1.bf16.msra.mxu0 0
    %156 = vmatprep.subr.bf16.mxu0 0
    %157 = vmatpush1.bf16.msra.mxu0 0
    %158 = vmatprep.subr.bf16.mxu0 0
    %159 = vmatpush1.bf16.msra.mxu0 0
    %160 = vmatprep.subr.bf16.mxu0 0
    %161 = vmatpush1.bf16.msra.mxu0 0
    %162 = vmatprep.subr.bf16.mxu0 0
    %163 = vmatpush1.bf16.msra.mxu0 0
    %164 = vmatprep.subr.bf16.mxu0 0
    %165 = vmatpush1.bf16.msra.mxu0 0
    %166 = vmatprep.subr.bf16.mxu0 0
    %167 = vmatpush1.bf16.msra.mxu0 0
    %168 = vmatprep.subr.bf16.mxu0 0
    %169 = vmatpush1.bf16.msra.mxu0 0
    %170 = vmatprep.subr.bf16.mxu0 0
    %171 = vmatpush1.bf16.msra.mxu0 0
    %172 = vmatprep.subr.bf16.mxu0 0
    %173 = vmatpush1.bf16.msra.mxu0 0
    %174 = vmatprep.subr.bf16.mxu0 0
    %175 = vmatpush1.bf16.msra.mxu0 0
    %176 = vmatprep.subr.bf16.mxu0 0
    %177 = vmatpush1.bf16.msra.mxu0 0
    %178 = vmatprep.mubr.bf16.mxu0 0
    %179 = vmatmul.mubr.bf16.gmra.mrb[0].mxu0 %v90
    %v180 = vpop.f32.mrb[0].mxu0
    %v181 = vadd.f32 0.0, %v180
    %v182 = vpop.f32.mrb[0].mxu0
    %v183 = vadd.f32 0.0, %v182
    %v184 = vpop.f32.mrb[0].mxu0
    %v185 = vpop.f32.mrb[0].mxu0
    %186 = vdwg.mxu0
    %v191 = vunpack.c.l.b16 %v64
    %v192 = vunpack.c.h.b16 %v64
    %v193 = vunpack.c.l.b16 %v65
    %v194 = vunpack.c.h.b16 %v65
    %v195 = vunpack.c.l.b16 %v66
    %v196 = vunpack.c.h.b16 %v66
    %v197 = vunpack.c.l.b16 %v67
    %v198 = vunpack.c.h.b16 %v67
    %v199 = vpack.c.b16 %v195, %v191
    %v200 = vpack.c.b16 %v196, %v192
    %v201 = vpack.c.b16 %v197, %v193
    %v202 = vpack.c.b16 %v198, %v194
    %vm203 = vcmask 97280
    %v205 = vsel %vm203, %v63, 0
    %vm207 = vcmask 1045504
    %v209 = vsel %vm207, %v199, 0
    %v212 = vsel %vm207, %v200, 0
    %v215 = vsel %vm207, %v201, 0
    %v218 = vsel %vm207, %v202, 0
    %220 = vmatprep.subr.bf16.mxu0 %v212
    %221 = vmatpush1.bf16.msra.mxu0 %v209
    %222 = vmatprep.subr.bf16.mxu0 0
    %223 = vmatpush1.bf16.msra.mxu0 0
    %224 = vmatprep.subr.bf16.mxu0 0
    %225 = vmatpush1.bf16.msra.mxu0 0
    %226 = vmatprep.subr.bf16.mxu0 0
    %227 = vmatpush1.bf16.msra.mxu0 0
    %228 = vmatprep.subr.bf16.mxu0 0
    %229 = vmatpush1.bf16.msra.mxu0 0
    %230 = vmatprep.subr.bf16.mxu0 0
    %231 = vmatpush1.bf16.msra.mxu0 0
    %232 = vmatprep.subr.bf16.mxu0 0
    %233 = vmatpush1.bf16.msra.mxu0 0
    %234 = vmatprep.subr.bf16.mxu0 0
    %235 = vmatpush1.bf16.msra.mxu0 0
    %236 = vmatprep.subr.bf16.mxu0 0
    %237 = vmatpush1.bf16.msra.mxu0 0
    %238 = vmatprep.subr.bf16.mxu0 0
    %239 = vmatpush1.bf16.msra.mxu0 0
    %240 = vmatprep.subr.bf16.mxu0 0
    %241 = vmatpush1.bf16.msra.mxu0 0
    %242 = vmatprep.subr.bf16.mxu0 0
    %243 = vmatpush1.bf16.msra.mxu0 0
    %244 = vmatprep.subr.bf16.mxu0 0
    %245 = vmatpush1.bf16.msra.mxu0 0
    %246 = vmatprep.subr.bf16.mxu0 0
    %247 = vmatpush1.bf16.msra.mxu0 0
    %248 = vmatprep.subr.bf16.mxu0 0
    %249 = vmatpush1.bf16.msra.mxu0 0
    %250 = vmatprep.subr.bf16.mxu0 0
    %251 = vmatpush1.bf16.msra.mxu0 0
    %252 = vmatprep.mubr.bf16.mxu0 0
    %253 = vmatmul.mubr.bf16.gmra.mrb[0].mxu0 %v205
    %v254 = vpop.f32.mrb[0].mxu0
    %v255 = vadd.f32 %v140, %v254
    %v256 = vpop.f32.mrb[0].mxu0
    %v257 = vadd.f32 %v142, %v256
    %v258 = vpop.f32.mrb[0].mxu0
    %v259 = vpop.f32.mrb[0].mxu0
    %260 = vdwg.mxu0
    %261 = vmatprep.subr.bf16.mxu0 %v218
    %262 = vmatpush1.bf16.msra.mxu0 %v215
    %263 = vmatprep.subr.bf16.mxu0 0
    %264 = vmatpush1.bf16.msra.mxu0 0
    %265 = vmatprep.subr.bf16.mxu0 0
    %266 = vmatpush1.bf16.msra.mxu0 0
    %267 = vmatprep.subr.bf16.mxu0 0
    %268 = vmatpush1.bf16.msra.mxu0 0
    %269 = vmatprep.subr.bf16.mxu0 0
    %270 = vmatpush1.bf16.msra.mxu0 0
    %271 = vmatprep.subr.bf16.mxu0 0
    %272 = vmatpush1.bf16.msra.mxu0 0
    %273 = vmatprep.subr.bf16.mxu0 0
    %274 = vmatpush1.bf16.msra.mxu0 0
    %275 = vmatprep.subr.bf16.mxu0 0
    %276 = vmatpush1.bf16.msra.mxu0 0
    %277 = vmatprep.subr.bf16.mxu0 0
    %278 = vmatpush1.bf16.msra.mxu0 0
    %279 = vmatprep.subr.bf16.mxu0 0
    %280 = vmatpush1.bf16.msra.mxu0 0
    %281 = vmatprep.subr.bf16.mxu0 0
    %282 = vmatpush1.bf16.msra.mxu0 0
    %283 = vmatprep.subr.bf16.mxu0 0
    %284 = vmatpush1.bf16.msra.mxu0 0
    %285 = vmatprep.subr.bf16.mxu0 0
    %286 = vmatpush1.bf16.msra.mxu0 0
    %287 = vmatprep.subr.bf16.mxu0 0
    %288 = vmatpush1.bf16.msra.mxu0 0
    %289 = vmatprep.subr.bf16.mxu0 0
    %290 = vmatpush1.bf16.msra.mxu0 0
    %291 = vmatprep.subr.bf16.mxu0 0
    %292 = vmatpush1.bf16.msra.mxu0 0
    %293 = vmatprep.mubr.bf16.mxu0 0
    %294 = vmatmul.mubr.bf16.gmra.mrb[0].mxu0 %v205
    %v295 = vpop.f32.mrb[0].mxu0
    %v296 = vadd.f32 %v181, %v295
    %v297 = vpop.f32.mrb[0].mxu0
    %v298 = vadd.f32 %v183, %v297
    %v299 = vpop.f32.mrb[0].mxu0
    %v300 = vpop.f32.mrb[0].mxu0
    %301 = vdwg.mxu0
    %v302 = vld [vmem:[%s4] sm:$0xf]
    %v304 = vlaneseq
    %v305 = vshrl.u32 %v304, 7
    %v306 = vsub.s32 0, %v305
    %v307 = vrot.slane %v302, %v306
    %v308 = vlaneseq
    %v309 = vshrl.u32 %v308, 7
    %v310 = vsub.s32 1, %v309
    %v311 = vrot.slane %v302, %v310
    %v312 = vlaneseq
    %v313 = vshrl.u32 %v312, 7
    %v314 = vsub.s32 2, %v313
    %v315 = vrot.slane %v302, %v314
    %v316 = vlaneseq
    %v317 = vshrl.u32 %v316, 7
    %v318 = vsub.s32 3, %v317
    %v319 = vrot.slane %v302, %v318
    %v324 = vadd.f32 %v255, %v307
    %v325 = vadd.f32 %v257, %v311
    %v326 = vadd.f32 %v296, %v315
    %v327 = vadd.f32 %v298, %v319
    %v328 = vmax.f32 %v324, 0.0
    %v329 = vmax.f32 %v325, 0.0
    %v330 = vmax.f32 %v326, 0.0
    %v331 = vmax.f32 %v327, 0.0
    %v332 = vpack.c.bf16 %v328, %v328
    %v333 = vpack.c.bf16 %v329, %v329
    %v334 = vpack.c.bf16 %v330, %v330
    %v335 = vpack.c.bf16 %v331, %v331
    %v336 = vld [vmem:[%s5] sm:$0xff]
    %v337 = vld [vmem:[%s5 + $0x8] sm:$0xff]
    %v338 = vld [vmem:[%s5 + $0x10] sm:$0xff]
    %v339 = vld [vmem:[%s5 + $0x18] sm:$0xff]
    %v340 = vld [vmem:[%s5 + $0x20] sm:$0xff]
    %v341 = vld [vmem:[%s5 + $0x28] sm:$0xff]
    %v342 = vld [vmem:[%s5 + $0x30] sm:$0xff]
    %v343 = vld [vmem:[%s5 + $0x38] sm:$0xff]
    %v344 = vld [vmem:[%s5 + $0x40] sm:$0xff]
    %v345 = vld [vmem:[%s5 + $0x48] sm:$0xff]
    %v346 = vld [vmem:[%s5 + $0x50] sm:$0xff]
    %v347 = vld [vmem:[%s5 + $0x58] sm:$0xff]
    %v348 = vld [vmem:[%s5 + $0x60] sm:$0xff]
    %v349 = vld [vmem:[%s5 + $0x68] sm:$0xff]
    %v350 = vld [vmem:[%s5 + $0x70] sm:$0xff]
    %v351 = vld [vmem:[%s5 + $0x78] sm:$0xff]
    %v352 = vld [vmem:[%s5 + $0x80] sm:$0xff]
    %v353 = vld [vmem:[%s5 + $0x88] sm:$0xff]
    %v354 = vld [vmem:[%s5 + $0x90] sm:$0xff]
    %v355 = vld [vmem:[%s5 + $0x98] sm:$0xff]
    %v356 = vld [vmem:[%s5 + $0xa0] sm:$0xff]
    %v357 = vld [vmem:[%s5 + $0xa8] sm:$0xff]
    %v358 = vld [vmem:[%s5 + $0xb0] sm:$0xff]
    %v359 = vld [vmem:[%s5 + $0xb8] sm:$0xff]
    %v360 = vld [vmem:[%s5 + $0xc0] sm:$0xff]
    %v361 = vld [vmem:[%s5 + $0xc8] sm:$0xff]
    %v362 = vld [vmem:[%s5 + $0xd0] sm:$0xff]
    %v363 = vld [vmem:[%s5 + $0xd8] sm:$0xff]
    %v364 = vld [vmem:[%s5 + $0xe0] sm:$0xff]
    %v365 = vld [vmem:[%s5 + $0xe8] sm:$0xff]
    %v366 = vld [vmem:[%s5 + $0xf0] sm:$0xff]
    %v367 = vld [vmem:[%s5 + $0xf8] sm:$0xff]
    %v368 = vld [vmem:[%s6] sm:$0x3]
    %v370 = vlaneseq
    %v371 = vshrl.u32 %v370, 7
    %v372 = vsub.s32 0, %v371
    %v373 = vrot.slane %v368, %v372
    %v374 = vlaneseq
    %v375 = vshrl.u32 %v374, 7
    %v376 = vsub.s32 1, %v375
    %v377 = vrot.slane %v368, %v376
    %v412 = vunpack.c.l.b16 %v336
    %v413 = vunpack.c.h.b16 %v336
    %v414 = vunpack.c.l.b16 %v337
    %v415 = vunpack.c.h.b16 %v337
    %v416 = vunpack.c.l.b16 %v338
    %v417 = vunpack.c.h.b16 %v338
    %v418 = vunpack.c.l.b16 %v339
    %v419 = vunpack.c.h.b16 %v339
    %v420 = vunpack.c.l.b16 %v340
    %v421 = vunpack.c.h.b16 %v340
    %v422 = vunpack.c.l.b16 %v341
    %v423 = vunpack.c.h.b16 %v341
    %v424 = vunpack.c.l.b16 %v342
    %v425 = vunpack.c.h.b16 %v342
    %v426 = vunpack.c.l.b16 %v343
    %v427 = vunpack.c.h.b16 %v343
    %v428 = vunpack.c.l.b16 %v344
    %v429 = vunpack.c.h.b16 %v344
    %v430 = vunpack.c.l.b16 %v345
    %v431 = vunpack.c.h.b16 %v345
    %v432 = vunpack.c.l.b16 %v346
    %v433 = vunpack.c.h.b16 %v346
    %v434 = vunpack.c.l.b16 %v347
    %v435 = vunpack.c.h.b16 %v347
    %v436 = vunpack.c.l.b16 %v348
    %v437 = vunpack.c.h.b16 %v348
    %v438 = vunpack.c.l.b16 %v349
    %v439 = vunpack.c.h.b16 %v349
    %v440 = vunpack.c.l.b16 %v350
    %v441 = vunpack.c.h.b16 %v350
    %v442 = vunpack.c.l.b16 %v351
    %v443 = vunpack.c.h.b16 %v351
    %v444 = vunpack.c.l.b16 %v352
    %v445 = vunpack.c.h.b16 %v352
    %v446 = vunpack.c.l.b16 %v353
    %v447 = vunpack.c.h.b16 %v353
    %v448 = vunpack.c.l.b16 %v354
    %v449 = vunpack.c.h.b16 %v354
    %v450 = vunpack.c.l.b16 %v355
    %v451 = vunpack.c.h.b16 %v355
    %v452 = vunpack.c.l.b16 %v356
    %v453 = vunpack.c.h.b16 %v356
    %v454 = vunpack.c.l.b16 %v357
    %v455 = vunpack.c.h.b16 %v357
    %v456 = vunpack.c.l.b16 %v358
    %v457 = vunpack.c.h.b16 %v358
    %v458 = vunpack.c.l.b16 %v359
    %v459 = vunpack.c.h.b16 %v359
    %v460 = vunpack.c.l.b16 %v360
    %v461 = vunpack.c.h.b16 %v360
    %v462 = vunpack.c.l.b16 %v361
    %v463 = vunpack.c.h.b16 %v361
    %v464 = vunpack.c.l.b16 %v362
    %v465 = vunpack.c.h.b16 %v362
    %v466 = vunpack.c.l.b16 %v363
    %v467 = vunpack.c.h.b16 %v363
    %v468 = vunpack.c.l.b16 %v364
    %v469 = vunpack.c.h.b16 %v364
    %v470 = vunpack.c.l.b16 %v365
    %v471 = vunpack.c.h.b16 %v365
    %v472 = vunpack.c.l.b16 %v366
    %v473 = vunpack.c.h.b16 %v366
    %v474 = vunpack.c.l.b16 %v367
    %v475 = vunpack.c.h.b16 %v367
    %v476 = vpack.c.b16 %v414, %v412
    %v477 = vpack.c.b16 %v415, %v413
    %v478 = vpack.c.b16 %v418, %v416
    %v479 = vpack.c.b16 %v419, %v417
    %v480 = vpack.c.b16 %v422, %v420
    %v481 = vpack.c.b16 %v423, %v421
    %v482 = vpack.c.b16 %v426, %v424
    %v483 = vpack.c.b16 %v427, %v425
    %v484 = vpack.c.b16 %v430, %v428
    %v485 = vpack.c.b16 %v431, %v429
    %v486 = vpack.c.b16 %v434, %v432
    %v487 = vpack.c.b16 %v435, %v433
    %v488 = vpack.c.b16 %v438, %v436
    %v489 = vpack.c.b16 %v439, %v437
    %v490 = vpack.c.b16 %v442, %v440
    %v491 = vpack.c.b16 %v443, %v441
    %v492 = vpack.c.b16 %v446, %v444
    %v493 = vpack.c.b16 %v447, %v445
    %v494 = vpack.c.b16 %v450, %v448
    %v495 = vpack.c.b16 %v451, %v449
    %v496 = vpack.c.b16 %v454, %v452
    %v497 = vpack.c.b16 %v455, %v453
    %v498 = vpack.c.b16 %v458, %v456
    %v499 = vpack.c.b16 %v459, %v457
    %v500 = vpack.c.b16 %v462, %v460
    %v501 = vpack.c.b16 %v463, %v461
    %v502 = vpack.c.b16 %v466, %v464
    %v503 = vpack.c.b16 %v467, %v465
    %v504 = vpack.c.b16 %v470, %v468
    %v505 = vpack.c.b16 %v471, %v469
    %v506 = vpack.c.b16 %v474, %v472
    %v507 = vpack.c.b16 %v475, %v473
    %540 = vmatprep.subr.bf16.mxu0 %v477
    %541 = vmatpush1.bf16.msra.mxu0 %v476
    %542 = vmatprep.subr.bf16.mxu0 %v479
    %543 = vmatpush1.bf16.msra.mxu0 %v478
    %544 = vmatprep.subr.bf16.mxu0 %v481
    %545 = vmatpush1.bf16.msra.mxu0 %v480
    %546 = vmatprep.subr.bf16.mxu0 %v483
    %547 = vmatpush1.bf16.msra.mxu0 %v482
    %548 = vmatprep.subr.bf16.mxu0 %v485
    %549 = vmatpush1.bf16.msra.mxu0 %v484
    %550 = vmatprep.subr.bf16.mxu0 %v487
    %551 = vmatpush1.bf16.msra.mxu0 %v486
    %552 = vmatprep.subr.bf16.mxu0 %v489
    %553 = vmatpush1.bf16.msra.mxu0 %v488
    %554 = vmatprep.subr.bf16.mxu0 %v491
    %555 = vmatpush1.bf16.msra.mxu0 %v490
    %556 = vmatprep.subr.bf16.mxu0 %v493
    %557 = vmatpush1.bf16.msra.mxu0 %v492
    %558 = vmatprep.subr.bf16.mxu0 %v495
    %559 = vmatpush1.bf16.msra.mxu0 %v494
    %560 = vmatprep.subr.bf16.mxu0 %v497
    %561 = vmatpush1.bf16.msra.mxu0 %v496
    %562 = vmatprep.subr.bf16.mxu0 %v499
    %563 = vmatpush1.bf16.msra.mxu0 %v498
    %564 = vmatprep.subr.bf16.mxu0 %v501
    %565 = vmatpush1.bf16.msra.mxu0 %v500
    %566 = vmatprep.subr.bf16.mxu0 %v503
    %567 = vmatpush1.bf16.msra.mxu0 %v502
    %568 = vmatprep.subr.bf16.mxu0 %v505
    %569 = vmatpush1.bf16.msra.mxu0 %v504
    %570 = vmatprep.subr.bf16.mxu0 %v507
    %571 = vmatpush1.bf16.msra.mxu0 %v506
    %572 = vmatprep.mubr.bf16.mxu0 %v333
    %573 = vmatmul.mubr.bf16.gmra.mrb[0].mxu0 %v332
    %v574 = vpop.f32.mrb[0].mxu0
    %v575 = vadd.f32 %v373, %v574
    %v576 = vpop.f32.mrb[0].mxu0
    %v577 = vadd.f32 %v377, %v576
    %v578 = vpop.f32.mrb[0].mxu0
    %v579 = vpop.f32.mrb[0].mxu0
    %580 = vdwg.mxu0
    %v581 = vmax.f32 %v575, 0.0
    %v582 = vmax.f32 %v577, 0.0
    %v583 = vpack.c.bf16 %v581, %v581
    %v584 = vpack.c.bf16 %v582, %v582
    %v585 = vld [vmem:[#allocation4] sm:$0xff]
    %v586 = vld [vmem:[#allocation4 + $0x8] sm:$0xff]
    %v587 = vld [vmem:[#allocation4 + $0x10] sm:$0xff]
    %v588 = vld [vmem:[#allocation4 + $0x18] sm:$0xff]
    %v589 = vld [vmem:[#allocation4 + $0x20] sm:$0xff]
    %v590 = vld [vmem:[#allocation4 + $0x28] sm:$0xff]
    %v591 = vld [vmem:[#allocation4 + $0x30] sm:$0xff]
    %v592 = vld [vmem:[#allocation4 + $0x38] sm:$0xff]
    %v593 = vld [vmem:[#allocation4 + $0x40] sm:$0xff]
    %v594 = vld [vmem:[#allocation4 + $0x48] sm:$0xff]
    %v595 = vld [vmem:[#allocation4 + $0x50] sm:$0xff]
    %v596 = vld [vmem:[#allocation4 + $0x58] sm:$0xff]
    %v597 = vld [vmem:[#allocation4 + $0x60] sm:$0xff]
    %v598 = vld [vmem:[#allocation4 + $0x68] sm:$0xff]
    %v599 = vld [vmem:[#allocation4 + $0x70] sm:$0xff]
    %v600 = vld [vmem:[#allocation4 + $0x78] sm:$0xff]
    %v601 = vld [vmem:[#allocation4 + $0x80] sm:$0xff]
    %v602 = vld [vmem:[#allocation4 + $0x88] sm:$0xff]
    %v603 = vld [vmem:[#allocation4 + $0x90] sm:$0xff]
    %v604 = vld [vmem:[#allocation4 + $0x98] sm:$0xff]
    %v605 = vld [vmem:[#allocation4 + $0xa0] sm:$0xff]
    %v606 = vld [vmem:[#allocation4 + $0xa8] sm:$0xff]
    %v607 = vld [vmem:[#allocation4 + $0xb0] sm:$0xff]
    %v608 = vld [vmem:[#allocation4 + $0xb8] sm:$0xff]
    %v609 = vld [vmem:[#allocation4 + $0xc0] sm:$0xff]
    %v610 = vld [vmem:[#allocation4 + $0xc8] sm:$0xff]
    %v611 = vld [vmem:[#allocation4 + $0xd0] sm:$0xff]
    %v612 = vld [vmem:[#allocation4 + $0xd8] sm:$0xff]
    %v613 = vld [vmem:[#allocation4 + $0xe0] sm:$0xff]
    %v614 = vld [vmem:[#allocation4 + $0xe8] sm:$0xff]
    %v615 = vld [vmem:[#allocation4 + $0xf0] sm:$0xff]
    %v616 = vld [vmem:[#allocation4 + $0xf8] sm:$0xff]
    %v617 = vld [vmem:[%s8] sm:$0x3]
    %v619 = vlaneseq
    %v620 = vshrl.u32 %v619, 7
    %v621 = vsub.s32 0, %v620
    %v622 = vrot.slane %v617, %v621
    %v623 = vlaneseq
    %v624 = vshrl.u32 %v623, 7
    %v625 = vsub.s32 1, %v624
    %v626 = vrot.slane %v617, %v625
    %v661 = vunpack.c.l.b16 %v585
    %v662 = vunpack.c.h.b16 %v585
    %v663 = vunpack.c.l.b16 %v586
    %v664 = vunpack.c.h.b16 %v586
    %v665 = vunpack.c.l.b16 %v587
    %v666 = vunpack.c.h.b16 %v587
    %v667 = vunpack.c.l.b16 %v588
    %v668 = vunpack.c.h.b16 %v588
    %v669 = vunpack.c.l.b16 %v589
    %v670 = vunpack.c.h.b16 %v589
    %v671 = vunpack.c.l.b16 %v590
    %v672 = vunpack.c.h.b16 %v590
    %v673 = vunpack.c.l.b16 %v591
    %v674 = vunpack.c.h.b16 %v591
    %v675 = vunpack.c.l.b16 %v592
    %v676 = vunpack.c.h.b16 %v592
    %v677 = vunpack.c.l.b16 %v593
    %v678 = vunpack.c.h.b16 %v593
    %v679 = vunpack.c.l.b16 %v594
    %v680 = vunpack.c.h.b16 %v594
    %v681 = vunpack.c.l.b16 %v595
    %v682 = vunpack.c.h.b16 %v595
    %v683 = vunpack.c.l.b16 %v596
    %v684 = vunpack.c.h.b16 %v596
    %v685 = vunpack.c.l.b16 %v597
    %v686 = vunpack.c.h.b16 %v597
    %v687 = vunpack.c.l.b16 %v598
    %v688 = vunpack.c.h.b16 %v598
    %v689 = vunpack.c.l.b16 %v599
    %v690 = vunpack.c.h.b16 %v599
    %v691 = vunpack.c.l.b16 %v600
    %v692 = vunpack.c.h.b16 %v600
    %v693 = vunpack.c.l.b16 %v601
    %v694 = vunpack.c.h.b16 %v601
    %v695 = vunpack.c.l.b16 %v602
    %v696 = vunpack.c.h.b16 %v602
    %v697 = vunpack.c.l.b16 %v603
    %v698 = vunpack.c.h.b16 %v603
    %v699 = vunpack.c.l.b16 %v604
    %v700 = vunpack.c.h.b16 %v604
    %v701 = vunpack.c.l.b16 %v605
    %v702 = vunpack.c.h.b16 %v605
    %v703 = vunpack.c.l.b16 %v606
    %v704 = vunpack.c.h.b16 %v606
    %v705 = vunpack.c.l.b16 %v607
    %v706 = vunpack.c.h.b16 %v607
    %v707 = vunpack.c.l.b16 %v608
    %v708 = vunpack.c.h.b16 %v608
    %v709 = vunpack.c.l.b16 %v609
    %v710 = vunpack.c.h.b16 %v609
    %v711 = vunpack.c.l.b16 %v610
    %v712 = vunpack.c.h.b16 %v610
    %v713 = vunpack.c.l.b16 %v611
    %v714 = vunpack.c.h.b16 %v611
    %v715 = vunpack.c.l.b16 %v612
    %v716 = vunpack.c.h.b16 %v612
    %v717 = vunpack.c.l.b16 %v613
    %v718 = vunpack.c.h.b16 %v613
    %v719 = vunpack.c.l.b16 %v614
    %v720 = vunpack.c.h.b16 %v614
    %v721 = vunpack.c.l.b16 %v615
    %v722 = vunpack.c.h.b16 %v615
    %v723 = vunpack.c.l.b16 %v616
    %v724 = vunpack.c.h.b16 %v616
    %v725 = vpack.c.b16 %v663, %v661
    %v726 = vpack.c.b16 %v664, %v662
    %v727 = vpack.c.b16 %v667, %v665
    %v728 = vpack.c.b16 %v668, %v666
    %v729 = vpack.c.b16 %v671, %v669
    %v730 = vpack.c.b16 %v672, %v670
    %v731 = vpack.c.b16 %v675, %v673
    %v732 = vpack.c.b16 %v676, %v674
    %v733 = vpack.c.b16 %v679, %v677
    %v734 = vpack.c.b16 %v680, %v678
    %v735 = vpack.c.b16 %v683, %v681
    %v736 = vpack.c.b16 %v684, %v682
    %v737 = vpack.c.b16 %v687, %v685
    %v738 = vpack.c.b16 %v688, %v686
    %v739 = vpack.c.b16 %v691, %v689
    %v740 = vpack.c.b16 %v692, %v690
    %v741 = vpack.c.b16 %v695, %v693
    %v742 = vpack.c.b16 %v696, %v694
    %v743 = vpack.c.b16 %v699, %v697
    %v744 = vpack.c.b16 %v700, %v698
    %v745 = vpack.c.b16 %v703, %v701
    %v746 = vpack.c.b16 %v704, %v702
    %v747 = vpack.c.b16 %v707, %v705
    %v748 = vpack.c.b16 %v708, %v706
    %v749 = vpack.c.b16 %v711, %v709
    %v750 = vpack.c.b16 %v712, %v710
    %v751 = vpack.c.b16 %v715, %v713
    %v752 = vpack.c.b16 %v716, %v714
    %v753 = vpack.c.b16 %v719, %v717
    %v754 = vpack.c.b16 %v720, %v718
    %v755 = vpack.c.b16 %v723, %v721
    %v756 = vpack.c.b16 %v724, %v722
    %789 = vmatprep.subr.bf16.mxu0 %v726
    %790 = vmatpush1.bf16.msra.mxu0 %v725
    %791 = vmatprep.subr.bf16.mxu0 %v728
    %792 = vmatpush1.bf16.msra.mxu0 %v727
    %793 = vmatprep.subr.bf16.mxu0 %v730
    %794 = vmatpush1.bf16.msra.mxu0 %v729
    %795 = vmatprep.subr.bf16.mxu0 %v732
    %796 = vmatpush1.bf16.msra.mxu0 %v731
    %797 = vmatprep.subr.bf16.mxu0 %v734
    %798 = vmatpush1.bf16.msra.mxu0 %v733
    %799 = vmatprep.subr.bf16.mxu0 %v736
    %800 = vmatpush1.bf16.msra.mxu0 %v735
    %801 = vmatprep.subr.bf16.mxu0 %v738
    %802 = vmatpush1.bf16.msra.mxu0 %v737
    %803 = vmatprep.subr.bf16.mxu0 %v740
    %804 = vmatpush1.bf16.msra.mxu0 %v739
    %805 = vmatprep.subr.bf16.mxu0 %v742
    %806 = vmatpush1.bf16.msra.mxu0 %v741
    %807 = vmatprep.subr.bf16.mxu0 %v744
    %808 = vmatpush1.bf16.msra.mxu0 %v743
    %809 = vmatprep.subr.bf16.mxu0 %v746
    %810 = vmatpush1.bf16.msra.mxu0 %v745
    %811 = vmatprep.subr.bf16.mxu0 %v748
    %812 = vmatpush1.bf16.msra.mxu0 %v747
    %813 = vmatprep.subr.bf16.mxu0 %v750
    %814 = vmatpush1.bf16.msra.mxu0 %v749
    %815 = vmatprep.subr.bf16.mxu0 %v752
    %816 = vmatpush1.bf16.msra.mxu0 %v751
    %817 = vmatprep.subr.bf16.mxu0 %v754
    %818 = vmatpush1.bf16.msra.mxu0 %v753
    %819 = vmatprep.subr.bf16.mxu0 %v756
    %820 = vmatpush1.bf16.msra.mxu0 %v755
    %821 = vmatprep.mubr.bf16.mxu0 %v335
    %822 = vmatmul.mubr.bf16.gmra.mrb[0].mxu0 %v334
    %v823 = vpop.f32.mrb[0].mxu0
    %v824 = vadd.f32 %v622, %v823
    %v825 = vpop.f32.mrb[0].mxu0
    %v826 = vadd.f32 %v626, %v825
    %v827 = vpop.f32.mrb[0].mxu0
    %v828 = vpop.f32.mrb[0].mxu0
    %829 = vdwg.mxu0
    %v830 = vmax.f32 %v824, 0.0
    %v831 = vmax.f32 %v826, 0.0
    %v832 = vpack.c.bf16 %v830, %v830
    %v833 = vpack.c.bf16 %v831, %v831
    %v834 = vld [vmem:[%s9] sm:$0xf]
    %v835 = vld [vmem:[%s9 + $0x4] sm:$0xf]
    %v836 = vld [vmem:[%s9 + $0x8] sm:$0xf]
    %v837 = vld [vmem:[%s9 + $0xc] sm:$0xf]
    %v838 = vld [vmem:[%s9 + $0x10] sm:$0xf]
    %v839 = vld [vmem:[%s9 + $0x14] sm:$0xf]
    %v840 = vld [vmem:[%s9 + $0x18] sm:$0xf]
    %v841 = vld [vmem:[%s9 + $0x1c] sm:$0xf]
    %v842 = vld [vmem:[%s9 + $0x20] sm:$0xf]
    %v843 = vld [vmem:[%s9 + $0x24] sm:$0xf]
    %v844 = vld [vmem:[%s9 + $0x28] sm:$0xf]
    %v845 = vld [vmem:[%s9 + $0x2c] sm:$0xf]
    %v846 = vld [vmem:[%s9 + $0x30] sm:$0xf]
    %v847 = vld [vmem:[%s9 + $0x34] sm:$0xf]
    %v848 = vld [vmem:[%s9 + $0x38] sm:$0xf]
    %v849 = vld [vmem:[%s9 + $0x3c] sm:$0xf]
    %v850 = vld [vmem:[%s9 + $0x40] sm:$0xf]
    %v851 = vld [vmem:[%s9 + $0x44] sm:$0xf]
    %v852 = vld [vmem:[%s9 + $0x48] sm:$0xf]
    %v853 = vld [vmem:[%s9 + $0x4c] sm:$0xf]
    %v854 = vld [vmem:[%s9 + $0x50] sm:$0xf]
    %v855 = vld [vmem:[%s9 + $0x54] sm:$0xf]
    %v856 = vld [vmem:[%s9 + $0x58] sm:$0xf]
    %v857 = vld [vmem:[%s9 + $0x5c] sm:$0xf]
    %v858 = vld [vmem:[%s9 + $0x60] sm:$0xf]
    %v859 = vld [vmem:[%s9 + $0x64] sm:$0xf]
    %v860 = vld [vmem:[%s9 + $0x68] sm:$0xf]
    %v861 = vld [vmem:[%s9 + $0x6c] sm:$0xf]
    %v862 = vld [vmem:[%s9 + $0x70] sm:$0xf]
    %v863 = vld [vmem:[%s9 + $0x74] sm:$0xf]
    %v864 = vld [vmem:[%s9 + $0x78] sm:$0xf]
    %v865 = vld [vmem:[%s9 + $0x7c] sm:$0xf]
    %v866 = vld [vmem:[#allocation2] sm:$0x1]
    %v868 = vlaneseq
    %v869 = vshrl.u32 %v868, 7
    %v870 = vsub.s32 0, %v869
    %v871 = vrot.slane %v866, %v870
    %v905 = vunpack.c.l.b16 %v834
    %v906 = vunpack.c.l.b16 %v835
    %v907 = vunpack.c.l.b16 %v836
    %v908 = vunpack.c.l.b16 %v837
    %v909 = vunpack.c.l.b16 %v838
    %v910 = vunpack.c.l.b16 %v839
    %v911 = vunpack.c.l.b16 %v840
    %v912 = vunpack.c.l.b16 %v841
    %v913 = vunpack.c.l.b16 %v842
    %v914 = vunpack.c.l.b16 %v843
    %v915 = vunpack.c.l.b16 %v844
    %v916 = vunpack.c.l.b16 %v845
    %v917 = vunpack.c.l.b16 %v846
    %v918 = vunpack.c.l.b16 %v847
    %v919 = vunpack.c.l.b16 %v848
    %v920 = vunpack.c.l.b16 %v849
    %v921 = vunpack.c.l.b16 %v850
    %v922 = vunpack.c.l.b16 %v851
    %v923 = vunpack.c.l.b16 %v852
    %v924 = vunpack.c.l.b16 %v853
    %v925 = vunpack.c.l.b16 %v854
    %v926 = vunpack.c.l.b16 %v855
    %v927 = vunpack.c.l.b16 %v856
    %v928 = vunpack.c.l.b16 %v857
    %v929 = vunpack.c.l.b16 %v858
    %v930 = vunpack.c.l.b16 %v859
    %v931 = vunpack.c.l.b16 %v860
    %v932 = vunpack.c.l.b16 %v861
    %v933 = vunpack.c.l.b16 %v862
    %v934 = vunpack.c.l.b16 %v863
    %v935 = vunpack.c.l.b16 %v864
    %v936 = vunpack.c.l.b16 %v865
    %v937 = vpack.c.b16 %v906, %v905
    %v938 = vpack.c.b16 %v908, %v907
    %v939 = vpack.c.b16 %v910, %v909
    %v940 = vpack.c.b16 %v912, %v911
    %v941 = vpack.c.b16 %v914, %v913
    %v942 = vpack.c.b16 %v916, %v915
    %v943 = vpack.c.b16 %v918, %v917
    %v944 = vpack.c.b16 %v920, %v919
    %v945 = vpack.c.b16 %v922, %v921
    %v946 = vpack.c.b16 %v924, %v923
    %v947 = vpack.c.b16 %v926, %v925
    %v948 = vpack.c.b16 %v928, %v927
    %v949 = vpack.c.b16 %v930, %v929
    %v950 = vpack.c.b16 %v932, %v931
    %v951 = vpack.c.b16 %v934, %v933
    %v952 = vpack.c.b16 %v936, %v935
    %969 = vmatprep.subr.bf16.mxu0 0
    %970 = vmatpush1.bf16.msra.mxu0 %v937
    %971 = vmatprep.subr.bf16.mxu0 0
    %972 = vmatpush1.bf16.msra.mxu0 %v938
    %973 = vmatprep.subr.bf16.mxu0 0
    %974 = vmatpush1.bf16.msra.mxu0 %v939
    %975 = vmatprep.subr.bf16.mxu0 0
    %976 = vmatpush1.bf16.msra.mxu0 %v940
    %977 = vmatprep.subr.bf16.mxu0 0
    %978 = vmatpush1.bf16.msra.mxu0 %v941
    %979 = vmatprep.subr.bf16.mxu0 0
    %980 = vmatpush1.bf16.msra.mxu0 %v942
    %981 = vmatprep.subr.bf16.mxu0 0
    %982 = vmatpush1.bf16.msra.mxu0 %v943
    %983 = vmatprep.subr.bf16.mxu0 0
    %984 = vmatpush1.bf16.msra.mxu0 %v944
    %985 = vmatprep.subr.bf16.mxu0 0
    %986 = vmatpush1.bf16.msra.mxu0 %v945
    %987 = vmatprep.subr.bf16.mxu0 0
    %988 = vmatpush1.bf16.msra.mxu0 %v946
    %989 = vmatprep.subr.bf16.mxu0 0
    %990 = vmatpush1.bf16.msra.mxu0 %v947
    %991 = vmatprep.subr.bf16.mxu0 0
    %992 = vmatpush1.bf16.msra.mxu0 %v948
    %993 = vmatprep.subr.bf16.mxu0 0
    %994 = vmatpush1.bf16.msra.mxu0 %v949
    %995 = vmatprep.subr.bf16.mxu0 0
    %996 = vmatpush1.bf16.msra.mxu0 %v950
    %997 = vmatprep.subr.bf16.mxu0 0
    %998 = vmatpush1.bf16.msra.mxu0 %v951
    %999 = vmatprep.subr.bf16.mxu0 0
    %1000 = vmatpush1.bf16.msra.mxu0 %v952
    %1001 = vmatprep.mubr.bf16.mxu0 %v584
    %1002 = vmatmul.mubr.bf16.gmra.mrb[0].mxu0 %v583
    %v1003 = vpop.f32.mrb[0].mxu0
    %v1004 = vadd.f32 %v871, %v1003
    %v1005 = vpop.f32.mrb[0].mxu0
    %v1006 = vpop.f32.mrb[0].mxu0
    %v1007 = vpop.f32.mrb[0].mxu0
    %1008 = vdwg.mxu0
    %v1009 = vld [vmem:[%s11] sm:$0xf]
    %v1010 = vld [vmem:[%s11 + $0x4] sm:$0xf]
    %v1011 = vld [vmem:[%s11 + $0x8] sm:$0xf]
    %v1012 = vld [vmem:[%s11 + $0xc] sm:$0xf]
    %v1013 = vld [vmem:[%s11 + $0x10] sm:$0xf]
    %v1014 = vld [vmem:[%s11 + $0x14] sm:$0xf]
    %v1015 = vld [vmem:[%s11 + $0x18] sm:$0xf]
    %v1016 = vld [vmem:[%s11 + $0x1c] sm:$0xf]
    %v1017 = vld [vmem:[%s11 + $0x20] sm:$0xf]
    %v1018 = vld [vmem:[%s11 + $0x24] sm:$0xf]
    %v1019 = vld [vmem:[%s11 + $0x28] sm:$0xf]
    %v1020 = vld [vmem:[%s11 + $0x2c] sm:$0xf]
    %v1021 = vld [vmem:[%s11 + $0x30] sm:$0xf]
    %v1022 = vld [vmem:[%s11 + $0x34] sm:$0xf]
    %v1023 = vld [vmem:[%s11 + $0x38] sm:$0xf]
    %v1024 = vld [vmem:[%s11 + $0x3c] sm:$0xf]
    %v1025 = vld [vmem:[%s11 + $0x40] sm:$0xf]
    %v1026 = vld [vmem:[%s11 + $0x44] sm:$0xf]
    %v1027 = vld [vmem:[%s11 + $0x48] sm:$0xf]
    %v1028 = vld [vmem:[%s11 + $0x4c] sm:$0xf]
    %v1029 = vld [vmem:[%s11 + $0x50] sm:$0xf]
    %v1030 = vld [vmem:[%s11 + $0x54] sm:$0xf]
    %v1031 = vld [vmem:[%s11 + $0x58] sm:$0xf]
    %v1032 = vld [vmem:[%s11 + $0x5c] sm:$0xf]
    %v1033 = vld [vmem:[%s11 + $0x60] sm:$0xf]
    %v1034 = vld [vmem:[%s11 + $0x64] sm:$0xf]
    %v1035 = vld [vmem:[%s11 + $0x68] sm:$0xf]
    %v1036 = vld [vmem:[%s11 + $0x6c] sm:$0xf]
    %v1037 = vld [vmem:[%s11 + $0x70] sm:$0xf]
    %v1038 = vld [vmem:[%s11 + $0x74] sm:$0xf]
    %v1039 = vld [vmem:[%s11 + $0x78] sm:$0xf]
    %v1040 = vld [vmem:[%s11 + $0x7c] sm:$0xf]
    %v1041 = vld [vmem:[#allocation3] sm:$0x1]
    %v1043 = vlaneseq
    %v1044 = vshrl.u32 %v1043, 7
    %v1045 = vsub.s32 0, %v1044
    %v1046 = vrot.slane %v1041, %v1045
    %v1080 = vunpack.c.l.b16 %v1009
    %v1081 = vunpack.c.l.b16 %v1010
    %v1082 = vunpack.c.l.b16 %v1011
    %v1083 = vunpack.c.l.b16 %v1012
    %v1084 = vunpack.c.l.b16 %v1013
    %v1085 = vunpack.c.l.b16 %v1014
    %v1086 = vunpack.c.l.b16 %v1015
    %v1087 = vunpack.c.l.b16 %v1016
    %v1088 = vunpack.c.l.b16 %v1017
    %v1089 = vunpack.c.l.b16 %v1018
    %v1090 = vunpack.c.l.b16 %v1019
    %v1091 = vunpack.c.l.b16 %v1020
    %v1092 = vunpack.c.l.b16 %v1021
    %v1093 = vunpack.c.l.b16 %v1022
    %v1094 = vunpack.c.l.b16 %v1023
    %v1095 = vunpack.c.l.b16 %v1024
    %v1096 = vunpack.c.l.b16 %v1025
    %v1097 = vunpack.c.l.b16 %v1026
    %v1098 = vunpack.c.l.b16 %v1027
    %v1099 = vunpack.c.l.b16 %v1028
    %v1100 = vunpack.c.l.b16 %v1029
    %v1101 = vunpack.c.l.b16 %v1030
    %v1102 = vunpack.c.l.b16 %v1031
    %v1103 = vunpack.c.l.b16 %v1032
    %v1104 = vunpack.c.l.b16 %v1033
    %v1105 = vunpack.c.l.b16 %v1034
    %v1106 = vunpack.c.l.b16 %v1035
    %v1107 = vunpack.c.l.b16 %v1036
    %v1108 = vunpack.c.l.b16 %v1037
    %v1109 = vunpack.c.l.b16 %v1038
    %v1110 = vunpack.c.l.b16 %v1039
    %v1111 = vunpack.c.l.b16 %v1040
    %v1112 = vpack.c.b16 %v1081, %v1080
    %v1113 = vpack.c.b16 %v1083, %v1082
    %v1114 = vpack.c.b16 %v1085, %v1084
    %v1115 = vpack.c.b16 %v1087, %v1086
    %v1116 = vpack.c.b16 %v1089, %v1088
    %v1117 = vpack.c.b16 %v1091, %v1090
    %v1118 = vpack.c.b16 %v1093, %v1092
    %v1119 = vpack.c.b16 %v1095, %v1094
    %v1120 = vpack.c.b16 %v1097, %v1096
    %v1121 = vpack.c.b16 %v1099, %v1098
    %v1122 = vpack.c.b16 %v1101, %v1100
    %v1123 = vpack.c.b16 %v1103, %v1102
    %v1124 = vpack.c.b16 %v1105, %v1104
    %v1125 = vpack.c.b16 %v1107, %v1106
    %v1126 = vpack.c.b16 %v1109, %v1108
    %v1127 = vpack.c.b16 %v1111, %v1110
    %1144 = vmatprep.subr.bf16.mxu0 0
    %1145 = vmatpush1.bf16.msra.mxu0 %v1112
    %1146 = vmatprep.subr.bf16.mxu0 0
    %1147 = vmatpush1.bf16.msra.mxu0 %v1113
    %1148 = vmatprep.subr.bf16.mxu0 0
    %1149 = vmatpush1.bf16.msra.mxu0 %v1114
    %1150 = vmatprep.subr.bf16.mxu0 0
    %1151 = vmatpush1.bf16.msra.mxu0 %v1115
    %1152 = vmatprep.subr.bf16.mxu0 0
    %1153 = vmatpush1.bf16.msra.mxu0 %v1116
    %1154 = vmatprep.subr.bf16.mxu0 0
    %1155 = vmatpush1.bf16.msra.mxu0 %v1117
    %1156 = vmatprep.subr.bf16.mxu0 0
    %1157 = vmatpush1.bf16.msra.mxu0 %v1118
    %1158 = vmatprep.subr.bf16.mxu0 0
    %1159 = vmatpush1.bf16.msra.mxu0 %v1119
    %1160 = vmatprep.subr.bf16.mxu0 0
    %1161 = vmatpush1.bf16.msra.mxu0 %v1120
    %1162 = vmatprep.subr.bf16.mxu0 0
    %1163 = vmatpush1.bf16.msra.mxu0 %v1121
    %1164 = vmatprep.subr.bf16.mxu0 0
    %1165 = vmatpush1.bf16.msra.mxu0 %v1122
    %1166 = vmatprep.subr.bf16.mxu0 0
    %1167 = vmatpush1.bf16.msra.mxu0 %v1123
    %1168 = vmatprep.subr.bf16.mxu0 0
    %1169 = vmatpush1.bf16.msra.mxu0 %v1124
    %1170 = vmatprep.subr.bf16.mxu0 0
    %1171 = vmatpush1.bf16.msra.mxu0 %v1125
    %1172 = vmatprep.subr.bf16.mxu0 0
    %1173 = vmatpush1.bf16.msra.mxu0 %v1126
    %1174 = vmatprep.subr.bf16.mxu0 0
    %1175 = vmatpush1.bf16.msra.mxu0 %v1127
    %1176 = vmatprep.mubr.bf16.mxu0 %v833
    %1177 = vmatmul.mubr.bf16.gmra.mrb[0].mxu0 %v832
    %v1178 = vpop.f32.mrb[0].mxu0
    %v1179 = vadd.f32 %v1046, %v1178
    %v1180 = vpop.f32.mrb[0].mxu0
    %v1181 = vpop.f32.mrb[0].mxu0
    %v1182 = vpop.f32.mrb[0].mxu0
    %1183 = vdwg.mxu0
    %1185 = vrot.lane.b32.xlu0 %v1179, 1
    %v1186 = vpop.permute.xlu0 %1185
    %vm1188 = vcmask 7168
    %v1189 = vsel %vm1188, %v1004, %v1186
    %vm1190 = vcmask 15360
    %1191 = vst.msk [vmem:[%s13] sm:$0xff] %vm1190, %v1189
    // Predicated region
    $region58: #{critic_forward.1} parent=1 // pred_check
      _
    $region59: #{critic_forward.1} parent=1 // pred_check_branch
      %1193 = sbr.rel (0) target = $region61
    $region60: #{critic_forward.1} parent=1 // pred_region
      _
    $region61: #{critic_forward.1} parent=1 // pred_fallthru
      _
    // Predicated region
    $region62: #{critic_forward.1} parent=1 // pred_check
      _
    $region63: #{critic_forward.1} parent=1 // pred_check_branch
      %1195 = sbr.rel (0) target = $region65
    $region64: #{critic_forward.1} parent=1 // pred_region
      _
    $region65: #{critic_forward.1} parent=1 // pred_fallthru
      _
    %1196 = vsyncpa [#allocation5], 1

</llo_original>
